<compile_context>
chip_gen: v5e
topology: v5e:2x2
jax: 0.10.0
libtpu: 0.0.40
codegen_flags: <defaults>
</compile_context>

<pallas_src>
import functools

import jax
import jax.numpy as jnp
from jax import lax
from jax.experimental import pallas as pl
from jax.experimental.pallas import tpu as pltpu


def _multitask_loss_kernel(preds0_ref, type_ref, logits_ref, day_ref, logvars_ref,
                           out_ref, acc0_ref, acc1_ref, *, batch, tile):
    i = pl.program_id(0)

    @pl.when(i == 0)
    def _init():
        acc0_ref[...] = jnp.zeros_like(acc0_ref)
        acc1_ref[...] = jnp.zeros_like(acc1_ref)

    # Validity mask for padded batch columns (batch is a compile-time constant).
    col = lax.broadcasted_iota(jnp.int32, (1, tile), 1) + i * tile    # global batch idx
    valid = col < batch                                               # (1, tile) bool

    # ---- task 0: squared-error partial sums (lane-dense (1, tile)) ----
    diff = preds0_ref[...] - type_ref[...]                            # (1, tile) f32
    acc0_ref[...] += jnp.where(valid, diff * diff, 0.0)

    # ---- task 1: cross-entropy partial sums; logits are (C, tile), batch on lanes ----
    logits = logits_ref[...]                                          # (C, tile) f32
    day = day_ref[...]                                                # (1, tile) i32
    cls = lax.broadcasted_iota(jnp.int32, logits.shape, 0)            # class id per sublane
    m = jnp.max(logits, axis=0, keepdims=True)                        # (1, tile) sublane reduce
    lse = jnp.log(jnp.sum(jnp.exp(logits - m), axis=0, keepdims=True)) + m
    picked = jnp.sum(jnp.where(cls == day, logits, 0.0), axis=0, keepdims=True)
    nll = lse - picked                                                # (1, tile)
    acc1_ref[...] += jnp.where(valid, nll, 0.0)

    @pl.when(i == pl.num_programs(0) - 1)
    def _finalize():
        inv_b = jnp.float32(1.0 / batch)
        loss0 = jnp.sum(acc0_ref[...]) * inv_b
        loss1 = jnp.sum(acc1_ref[...]) * inv_b
        lv0 = logvars_ref[0]
        lv1 = logvars_ref[1]
        total = jnp.exp(-lv0) * loss0 + lv0 + jnp.exp(-lv1) * loss1 + lv1
        out_ref[...] = total.reshape(1, 1)


def multitask_loss(preds0, type_t, preds1, day, log_vars, *, tile=None):
    """preds0:(B,1)|(B,) f32, type_t:(B,1)|(B,) f32, preds1:(B,C) f32 logits,
    day:(B,)|(B,1) int labels, log_vars:(2,) f32 parameter."""
    B, C = preds1.shape
    p0 = preds0.reshape(-1).astype(jnp.float32)
    t0 = type_t.reshape(-1).astype(jnp.float32)
    dy = day.reshape(-1).astype(jnp.int32)
    lv = log_vars.reshape(-1).astype(jnp.float32)

    LANE = 128
    if tile is None:
        # lane-dense batch tile, capped at 4096 lanes per grid step
        tile = LANE * max(1, min(pl.cdiv(B, LANE), 32))
    n_tiles = pl.cdiv(B, tile)
    b_pad = n_tiles * tile
    pad = b_pad - B

    # Lane-dense layouts (batch on the 128-lane axis); logits transposed to (C, B_pad).
    p0p = jnp.pad(p0, (0, pad)).reshape(1, b_pad)
    t0p = jnp.pad(t0, (0, pad)).reshape(1, b_pad)
    dyp = jnp.pad(dy, (0, pad)).reshape(1, b_pad)
    logits_t = jnp.pad(preds1.astype(jnp.float32), ((0, pad), (0, 0))).T  # (C, B_pad)

    kernel = functools.partial(_multitask_loss_kernel, batch=B, tile=tile)

    out = pl.pallas_call(
        kernel,
        out_shape=jax.ShapeDtypeStruct((1, 1), jnp.float32),
        grid_spec=pltpu.PrefetchScalarGridSpec(
            num_scalar_prefetch=0,
            grid=(n_tiles,),
            in_specs=[
                pl.BlockSpec((1, tile), lambda i: (0, i)),     # preds0
                pl.BlockSpec((1, tile), lambda i: (0, i)),     # type
                pl.BlockSpec((C, tile), lambda i: (0, i)),     # logits (C, B_pad)
                pl.BlockSpec((1, tile), lambda i: (0, i)),     # day labels
                pl.BlockSpec(memory_space=pltpu.MemorySpace.SMEM),  # log_vars (scalar path)
            ],
            out_specs=pl.BlockSpec((1, 1), lambda i: (0, 0)),
            scratch_shapes=[
                pltpu.VMEM((1, tile), jnp.float32),   # squared-error partial sums
                pltpu.VMEM((1, tile), jnp.float32),   # NLL partial sums
            ],
        ),
        compiler_params=pltpu.CompilerParams(
            dimension_semantics=("arbitrary",),        # reduction axis (accumulator)
            vmem_limit_bytes=32 * 1024 * 1024,         # fits v5e/v6e/v7x scoped VMEM
        ),
    )(p0p, t0p, logits_t, dyp, lv)
    # TODO(synk): on v7x a leading size-2 "parallel" grid axis with per-core partial
    # sums could use the second TensorCore; omitted to keep a single-pass reduction.
    return out[0, 0]


def multitask_loss_ref(preds0, type_t, preds1, day, log_vars):
    p0 = preds0.reshape(-1)
    t0 = type_t.reshape(-1)
    dy = day.reshape(-1)
    loss0 = jnp.mean((p0 - t0) ** 2)
    lse = jax.scipy.special.logsumexp(preds1, axis=-1)
    picked = preds1[jnp.arange(preds1.shape[0]), dy]
    loss1 = jnp.mean(lse - picked)
    lv0, lv1 = log_vars[0], log_vars[1]
    return jnp.exp(-lv0) * loss0 + lv0 + jnp.exp(-lv1) * loss1 + lv1


if __name__ == "__main__":
    B, C = 8, 7           # batch=8, 7 classes for "day"
    TASK_NUM = 2

    key = jax.random.PRNGKey(0)
    k0, k1, k2, k3 = jax.random.split(key, 4)

    preds0 = jax.random.normal(k0, (B, 1), dtype=jnp.float32)    # regression head output
    type_t = jax.random.normal(k1, (B, 1), dtype=jnp.float32)    # regression target
    preds1 = jax.random.normal(k2, (B, C), dtype=jnp.float32)    # classification logits
    day = jax.random.randint(k3, (B,), 0, C, dtype=jnp.int32)    # class labels

    # nn.Parameter(torch.zeros(task_num)) -> deterministic zeros
    log_vars = jnp.zeros((TASK_NUM,), dtype=jnp.float32)

    out = multitask_loss(preds0, type_t, preds1, day, log_vars)
    out = jax.block_until_ready(out)

    ref = multitask_loss_ref(preds0, type_t, preds1, day, log_vars)
    assert jnp.allclose(out, ref, rtol=1e-5, atol=1e-5), (out, ref)

    print("KERNEL_OK")
</pallas_src>

<mosaic_0001>
module attributes {stable_mosaic.version = 11 : i64} {
  func.func @_multitask_loss_kernel(%arg0: i32, %arg1: memref<1x128xf32, #tpu.memory_space<vmem>>, %arg2: memref<1x128xf32, #tpu.memory_space<vmem>>, %arg3: memref<7x128xf32, #tpu.memory_space<vmem>>, %arg4: memref<1x128xi32, #tpu.memory_space<vmem>>, %arg5: memref<2xf32, #tpu.memory_space<smem>>, %arg6: memref<1x1xf32, #tpu.memory_space<vmem>>, %arg7: memref<1x128xf32, #tpu.memory_space<vmem>>, %arg8: memref<1x128xf32, #tpu.memory_space<vmem>>) attributes {dimension_semantics = [#tpu.dimension_semantics<arbitrary>], iteration_bounds = array<i64: 1>, scalar_prefetch = 0 : i64, scratch_operands = 2 : i64, tpu.core_type = #tpu.core_type<tc>, window_params = [{transform_indices = @transform_0, window_bounds = array<i64: 1, 128>}, {transform_indices = @transform_1, window_bounds = array<i64: 1, 128>}, {transform_indices = @transform_2, window_bounds = array<i64: 7, 128>}, {transform_indices = @transform_3, window_bounds = array<i64: 1, 128>}, {transform_indices = @transform_4, window_bounds = array<i64: 2>}, {pipeline_mode = #tpu.pipeline_mode<synchronous>, transform_indices = @transform_5, window_bounds = array<i64: 1, 1>}]} {
    %c0_i32 = arith.constant 0 : i32
    %0 = arith.cmpi eq, %arg0, %c0_i32 : i32
    %1 = arith.extui %0 : i1 to i32
    %c0_i32_0 = arith.constant 0 : i32
    %2 = arith.cmpi ne, %1, %c0_i32_0 : i32
    scf.if %2 {
      %cst_23 = arith.constant 0.000000e+00 : f32
      %45 = vector.broadcast %cst_23 : f32 to vector<1x128xf32>
      %c0_24 = arith.constant 0 : index
      %c0_25 = arith.constant 0 : index
      %46 = vector.load %arg7[%c0_24, %c0_25] : memref<1x128xf32, #tpu.memory_space<vmem>>, vector<1x128xf32>
      tpu.vector_store %arg7[%c0_24, %c0_25], %45 {strides = array<i32>} : memref<1x128xf32, #tpu.memory_space<vmem>>, vector<1x128xf32>,
      %cst_26 = arith.constant 0.000000e+00 : f32
      %47 = vector.broadcast %cst_26 : f32 to vector<1x128xf32>
      %c0_27 = arith.constant 0 : index
      %c0_28 = arith.constant 0 : index
      %48 = vector.load %arg8[%c0_27, %c0_28] : memref<1x128xf32, #tpu.memory_space<vmem>>, vector<1x128xf32>
      tpu.vector_store %arg8[%c0_27, %c0_28], %47 {strides = array<i32>} : memref<1x128xf32, #tpu.memory_space<vmem>>, vector<1x128xf32>,
    } else {
    }
    %3 = tpu.iota {dimensions = array<i32: 1>} : vector<1x128xi32>
    %c128_i32 = arith.constant 128 : i32
    %4 = arith.muli %arg0, %c128_i32 : i32
    %5 = vector.broadcast %4 : i32 to vector<1x128xi32>
    %6 = arith.addi %3, %5 : vector<1x128xi32>
    %c8_i32 = arith.constant 8 : i32
    %7 = vector.broadcast %c8_i32 : i32 to vector<1x128xi32>
    %8 = arith.cmpi slt, %6, %7 : vector<1x128xi32>
    %c0 = arith.constant 0 : index
    %c0_1 = arith.constant 0 : index
    %9 = vector.load %arg1[%c0, %c0_1] : memref<1x128xf32, #tpu.memory_space<vmem>>, vector<1x128xf32>
    %c0_2 = arith.constant 0 : index
    %c0_3 = arith.constant 0 : index
    %10 = vector.load %arg2[%c0_2, %c0_3] : memref<1x128xf32, #tpu.memory_space<vmem>>, vector<1x128xf32>
    %11 = arith.subf %9, %10 : vector<1x128xf32>
    %c0_4 = arith.constant 0 : index
    %c0_5 = arith.constant 0 : index
    %12 = vector.load %arg7[%c0_4, %c0_5] : memref<1x128xf32, #tpu.memory_space<vmem>>, vector<1x128xf32>
    %13 = arith.mulf %11, %11 : vector<1x128xf32>
    %cst = arith.constant 0.000000e+00 : f32
    %14 = vector.broadcast %cst : f32 to vector<1x128xf32>
    %15 = arith.select %8, %13, %14 : vector<1x128xi1>, vector<1x128xf32>
    %16 = arith.addf %12, %15 : vector<1x128xf32>
    %c0_6 = arith.constant 0 : index
    %c0_7 = arith.constant 0 : index
    %17 = vector.load %arg7[%c0_6, %c0_7] : memref<1x128xf32, #tpu.memory_space<vmem>>, vector<1x128xf32>
    tpu.vector_store %arg7[%c0_6, %c0_7], %16 {strides = array<i32>} : memref<1x128xf32, #tpu.memory_space<vmem>>, vector<1x128xf32>,
    %c0_8 = arith.constant 0 : index
    %c0_9 = arith.constant 0 : index
    %18 = vector.load %arg3[%c0_8, %c0_9] : memref<7x128xf32, #tpu.memory_space<vmem>>, vector<7x128xf32>
    %c0_10 = arith.constant 0 : index
    %c0_11 = arith.constant 0 : index
    %19 = vector.load %arg4[%c0_10, %c0_11] : memref<1x128xi32, #tpu.memory_space<vmem>>, vector<1x128xi32>
    %20 = tpu.iota {dimensions = array<i32: 0>} : vector<7x128xi32>
    %cst_12 = arith.constant dense<0xFF800000> : vector<128xf32>
    %21 = vector.multi_reduction <maximumf>, %18, %cst_12 [0] : vector<7x128xf32> to vector<128xf32>
    %22 = vector.shape_cast %21 : vector<128xf32> to vector<1x128xf32>
    %23 = vector.broadcast %22 : vector<1x128xf32> to vector<7x128xf32>
    %24 = arith.subf %18, %23 : vector<7x128xf32>
    %25 = math.exp %24 : vector<7x128xf32>
    %cst_13 = arith.constant dense<0.000000e+00> : vector<128xf32>
    %26 = vector.multi_reduction <add>, %25, %cst_13 [0] : vector<7x128xf32> to vector<128xf32>
    %27 = vector.shape_cast %26 : vector<128xf32> to vector<1x128xf32>
    %28 = math.log %27 : vector<1x128xf32>
    %29 = arith.addf %28, %22 : vector<1x128xf32>
    %30 = vector.broadcast %19 : vector<1x128xi32> to vector<7x128xi32>
    %31 = arith.cmpi eq, %20, %30 : vector<7x128xi32>
    %cst_14 = arith.constant 0.000000e+00 : f32
    %32 = vector.broadcast %cst_14 : f32 to vector<7x128xf32>
    %33 = arith.select %31, %18, %32 : vector<7x128xi1>, vector<7x128xf32>
    %cst_15 = arith.constant dense<0.000000e+00> : vector<128xf32>
    %34 = vector.multi_reduction <add>, %33, %cst_15 [0] : vector<7x128xf32> to vector<128xf32>
    %35 = vector.shape_cast %34 : vector<128xf32> to vector<1x128xf32>
    %36 = arith.subf %29, %35 : vector<1x128xf32>
    %c0_16 = arith.constant 0 : index
    %c0_17 = arith.constant 0 : index
    %37 = vector.load %arg8[%c0_16, %c0_17] : memref<1x128xf32, #tpu.memory_space<vmem>>, vector<1x128xf32>
    %cst_18 = arith.constant 0.000000e+00 : f32
    %38 = vector.broadcast %cst_18 : f32 to vector<1x128xf32>
    %39 = arith.select %8, %36, %38 : vector<1x128xi1>, vector<1x128xf32>
    %40 = arith.addf %37, %39 : vector<1x128xf32>
    %c0_19 = arith.constant 0 : index
    %c0_20 = arith.constant 0 : index
    %41 = vector.load %arg8[%c0_19, %c0_20] : memref<1x128xf32, #tpu.memory_space<vmem>>, vector<1x128xf32>
    tpu.vector_store %arg8[%c0_19, %c0_20], %40 {strides = array<i32>} : memref<1x128xf32, #tpu.memory_space<vmem>>, vector<1x128xf32>,
    %c0_i32_21 = arith.constant 0 : i32
    %42 = arith.cmpi eq, %arg0, %c0_i32_21 : i32
    %43 = arith.extui %42 : i1 to i32
    %c0_i32_22 = arith.constant 0 : i32
    %44 = arith.cmpi ne, %43, %c0_i32_22 : i32
    scf.if %44 {
      %c0_23 = arith.constant 0 : index
      %c0_24 = arith.constant 0 : index
      %45 = vector.load %arg7[%c0_23, %c0_24] : memref<1x128xf32, #tpu.memory_space<vmem>>, vector<1x128xf32>
      %46 = vector.shape_cast %45 : vector<1x128xf32> to vector<1x1x128xf32>
      %cst_25 = arith.constant dense<0.000000e+00> : vector<1xf32>
      %47 = vector.multi_reduction <add>, %46, %cst_25 [1, 2] : vector<1x1x128xf32> to vector<1xf32>
      %48 = vector.shape_cast %47 : vector<1xf32> to vector<1x1x1xf32>
      %49 = vector.extract %48[0, 0, 0] : f32 from vector<1x1x1xf32>
      %cst_26 = arith.constant 1.250000e-01 : f32
      %50 = arith.mulf %49, %cst_26 : f32
      %c0_27 = arith.constant 0 : index
      %c0_28 = arith.constant 0 : index
      %51 = vector.load %arg8[%c0_27, %c0_28] : memref<1x128xf32, #tpu.memory_space<vmem>>, vector<1x128xf32>
      %52 = vector.shape_cast %51 : vector<1x128xf32> to vector<1x1x128xf32>
      %cst_29 = arith.constant dense<0.000000e+00> : vector<1xf32>
      %53 = vector.multi_reduction <add>, %52, %cst_29 [1, 2] : vector<1x1x128xf32> to vector<1xf32>
      %54 = vector.shape_cast %53 : vector<1xf32> to vector<1x1x1xf32>
      %55 = vector.extract %54[0, 0, 0] : f32 from vector<1x1x1xf32>
      %cst_30 = arith.constant 1.250000e-01 : f32
      %56 = arith.mulf %55, %cst_30 : f32
      %c0_31 = arith.constant 0 : index
      %57 = memref.load %arg5[%c0_31] : memref<2xf32, #tpu.memory_space<smem>>
      %c1 = arith.constant 1 : index
      %58 = memref.load %arg5[%c1] : memref<2xf32, #tpu.memory_space<smem>>
      %cst_32 = arith.constant 0.000000e+00 : f32
      %59 = arith.subf %cst_32, %57 : f32
      %60 = math.exp %59 : f32
      %61 = arith.mulf %60, %50 : f32
      %62 = arith.addf %61, %57 : f32
      %cst_33 = arith.constant 0.000000e+00 : f32
      %63 = arith.subf %cst_33, %58 : f32
      %64 = math.exp %63 : f32
      %65 = arith.mulf %64, %56 : f32
      %66 = arith.addf %62, %65 : f32
      %67 = arith.addf %66, %58 : f32
      %68 = vector.broadcast %67 : f32 to vector<1x1xf32>
      %c0_34 = arith.constant 0 : index
      %c0_35 = arith.constant 0 : index
      %69 = vector.load %arg6[%c0_34, %c0_35] : memref<1x1xf32, #tpu.memory_space<vmem>>, vector<1x1xf32>
      tpu.vector_store %arg6[%c0_34, %c0_35], %68 {strides = array<i32>} : memref<1x1xf32, #tpu.memory_space<vmem>>, vector<1x1xf32>,
    } else {
    }
    return
  }
  func.func @transform_0(%arg0: i32) -> (i32, i32) {
    %c0_i32 = arith.constant 0 : i32
    %c0_i32_0 = arith.constant 0 : i32
    return %c0_i32, %arg0 : i32, i32
  }
  func.func @transform_1(%arg0: i32) -> (i32, i32) {
    %c0_i32 = arith.constant 0 : i32
    %c0_i32_0 = arith.constant 0 : i32
    return %c0_i32, %arg0 : i32, i32
  }
  func.func @transform_2(%arg0: i32) -> (i32, i32) {
    %c0_i32 = arith.constant 0 : i32
    %c0_i32_0 = arith.constant 0 : i32
    return %c0_i32, %arg0 : i32, i32
  }
  func.func @transform_3(%arg0: i32) -> (i32, i32) {
    %c0_i32 = arith.constant 0 : i32
    %c0_i32_0 = arith.constant 0 : i32
    return %c0_i32, %arg0 : i32, i32
  }
  func.func @transform_4(%arg0: i32) -> i32 {
    %c0_i32 = arith.constant 0 : i32
    %c0_i32_0 = arith.constant 0 : i32
    return %c0_i32 : i32
  }
  func.func @transform_5(%arg0: i32) -> (i32, i32) {
    %c0_i32 = arith.constant 0 : i32
    %c0_i32_0 = arith.constant 0 : i32
    %c0_i32_1 = arith.constant 0 : i32
    return %c0_i32, %c0_i32_0 : i32, i32
  }
}

</mosaic_0001>

<llo_original>
// kernel: tpu_custom_call.1
$region0: #{tpu_custom_call.1}
  #allocation0 [shape = 'u32[]', space=smem, size = 0x4, offset = 0x4, fixed_abs, tag = 'smem constant byte address 0x4 - core index']
  #allocation1 [shape = 'u32[72,128]{1,0:T(1,128)}', space=vmem, size = 0x9000, scoped, tag = 'internal scratch']
  #allocation2 [shape = 'f32[1,128]{1,0:T(1,128)}', space=vmem, size = 0x200, scoped, tag = 'scratch operand']
  #allocation3 [shape = 'f32[1,128]{1,0:T(1,128)}', space=vmem, size = 0x200, scoped, tag = 'scratch operand']
  %s0 = inlined_call_operand.hbm [shape: f32[1,128], index: 0, kind: input, shape index: {}]
  %s1 = inlined_call_operand.hbm [shape: f32[1,128], index: 1, kind: input, shape index: {}]
  %s2 = inlined_call_operand.hbm [shape: f32[7,128], index: 2, kind: input, shape index: {}]
  %s3 = inlined_call_operand.vmem [shape: s32[1,128], index: 3, kind: input, shape index: {}]
  %s4 = inlined_call_operand.vmem [shape: f32[2], index: 4, kind: input, shape index: {}]
  %s5 = inlined_call_operand.hbm [shape: f32[1,1], index: 5, kind: output, shape index: {}]
  %s6 = sld [smem:[#allocation0]]
  $region54: #{tpu_custom_call.1} parent=0
    _
  %s8 = ssub.s32 1, %s6
  %s9 = scalar_select 0, %s8, %s6
  $region1: #{tpu_custom_call.1} parent=0
    #allocation4 [shape = 'u8[512]{0}', space=vmem, size = 0x400, scoped, tag = 'input window, operand 0, single buffered']
    #allocation5 [shape = 's32[1]{0}', space=sflag, size = 0x4, scoped, tag = 'scoped memory for tpu_custom_call.1']
    #allocation6 [shape = 's32[1]{0}', space=sflag, size = 0x4, scoped, tag = 'scoped memory for tpu_custom_call.1']
    #allocation7 [shape = 's32[1]{0}', space=sflag, size = 0x4, scoped, tag = 'scoped memory for tpu_custom_call.1']
    #allocation8 [shape = 'u8[512]{0}', space=vmem, size = 0x400, scoped, tag = 'input window, operand 1, single buffered']
    #allocation9 [shape = 's32[1]{0}', space=sflag, size = 0x4, scoped, tag = 'scoped memory for tpu_custom_call.1']
    #allocation10 [shape = 'u8[4096]{0}', space=vmem, size = 0x1000, scoped, tag = 'input window, operand 2, single buffered']
    #allocation11 [shape = 'u8[512]{0}', space=smem, size = 0x200, scoped, tag = 'input window, operand 4, single buffered']
    #allocation12 [shape = 'u8[512]{0}', space=vmem, size = 0x400, scoped, tag = 'output window, operand 0, single buffered']
    %10 = vsyncpa [#allocation5], 0
    %11 = vsyncpa [#allocation9], 0
    %12 = vsyncpa [#allocation7], 0
    %13 = vsyncpa [#allocation6], 0
    // Predicated region
    $region2: #{tpu_custom_call.1} parent=1 // pred_check
      _
    $region3: #{tpu_custom_call.1} parent=1 // pred_check_branch
      %15 = sbr.rel (0) target = $region5
    $region4: #{tpu_custom_call.1} parent=1 // pred_region
      %17 = vsyncadd [#allocation5], 0
      %s19 = sshll.u32 %s0, 4
      %s20 = int_to_ptr.hbm [resolvable:$true] %s19
      %s21 = sshll.u32 [#allocation4], 4
      %s22 = int_to_ptr.vmem [resolvable:$true] %s21
      %24 = dma.hbm_to_vmem [thread:$0]  %s20, 16, %s22, [#allocation5]
    $region5: #{tpu_custom_call.1} parent=1 // pred_fallthru
      _
    // Predicated region
    $region6: #{tpu_custom_call.1} parent=1 // pred_check
      _
    $region7: #{tpu_custom_call.1} parent=1 // pred_check_branch
      %26 = sbr.rel (0) target = $region9
    $region8: #{tpu_custom_call.1} parent=1 // pred_region
      %28 = vsyncadd [#allocation9], 0
      %s30 = sshll.u32 %s1, 4
      %s31 = int_to_ptr.hbm [resolvable:$true] %s30
      %s32 = sshll.u32 [#allocation8], 4
      %s33 = int_to_ptr.vmem [resolvable:$true] %s32
      %35 = dma.hbm_to_vmem [thread:$0]  %s31, 16, %s33, [#allocation9]
    $region9: #{tpu_custom_call.1} parent=1 // pred_fallthru
      _
    // Predicated region
    $region10: #{tpu_custom_call.1} parent=1 // pred_check
      _
    $region11: #{tpu_custom_call.1} parent=1 // pred_check_branch
      %37 = sbr.rel (0) target = $region13
    $region12: #{tpu_custom_call.1} parent=1 // pred_region
      %39 = vsyncadd [#allocation9], 0
      %s41 = sshll.u32 %s2, 4
      %s42 = int_to_ptr.hbm [resolvable:$true] %s41
      %s43 = sshll.u32 [#allocation10], 4
      %s44 = int_to_ptr.vmem [resolvable:$true] %s43
      %46 = dma.hbm_to_vmem [thread:$0]  %s42, 128, %s44, [#allocation9]
    $region13: #{tpu_custom_call.1} parent=1 // pred_fallthru
      _
    // Predicated region
    $region14: #{tpu_custom_call.1} parent=1 // pred_check
      _
    $region15: #{tpu_custom_call.1} parent=1 // pred_check_branch
      %48 = sbr.rel (0) target = $region17
    $region16: #{tpu_custom_call.1} parent=1 // pred_region
      _
    $region17: #{tpu_custom_call.1} parent=1 // pred_fallthru
      _
    // Predicated region
    $region18: #{tpu_custom_call.1} parent=1 // pred_check
      _
    $region19: #{tpu_custom_call.1} parent=1 // pred_check_branch
      %50 = sbr.rel (0) target = $region21
    $region20: #{tpu_custom_call.1} parent=1 // pred_region
      %52 = vsyncadd [#allocation7], 0
      %s54 = sshll.u32 %s4, 4
      %s55 = int_to_ptr.vmem [resolvable:$true] %s54
      %57 = dma.vmem_to_smem %s55, 16, [#allocation11], [#allocation7]
    $region21: #{tpu_custom_call.1} parent=1 // pred_fallthru
      _
    // Predicated region
    $region22: #{tpu_custom_call.1} parent=1 // pred_check
      _
    $region23: #{tpu_custom_call.1} parent=1 // pred_check_branch
      %59 = sbr.rel (0) target = $region25
    $region24: #{tpu_custom_call.1} parent=1 // pred_region
      %61 = dma.done [#allocation5], 16
    $region25: #{tpu_custom_call.1} parent=1 // pred_fallthru
      _
    // Predicated region
    $region26: #{tpu_custom_call.1} parent=1 // pred_check
      _
    $region27: #{tpu_custom_call.1} parent=1 // pred_check_branch
      %63 = sbr.rel (0) target = $region29
    $region28: #{tpu_custom_call.1} parent=1 // pred_region
      %65 = dma.done [#allocation9], 16
    $region29: #{tpu_custom_call.1} parent=1 // pred_fallthru
      _
    // Predicated region
    $region30: #{tpu_custom_call.1} parent=1 // pred_check
      _
    $region31: #{tpu_custom_call.1} parent=1 // pred_check_branch
      %67 = sbr.rel (0) target = $region33
    $region32: #{tpu_custom_call.1} parent=1 // pred_region
      %69 = dma.done [#allocation9], 128
    $region33: #{tpu_custom_call.1} parent=1 // pred_fallthru
      _
    // Predicated region
    $region34: #{tpu_custom_call.1} parent=1 // pred_check
      _
    $region35: #{tpu_custom_call.1} parent=1 // pred_check_branch
      %71 = sbr.rel (0) target = $region37
    $region36: #{tpu_custom_call.1} parent=1 // pred_region
      %73 = dma.done [#allocation7], 16
    $region37: #{tpu_custom_call.1} parent=1 // pred_fallthru
      _
    %74 = sfence
    %p75 = scmp.eq.s32.totalorder 0, 0
    // Predicated region
    $region38: #{tpu_custom_call.1} parent=1 // pred_check
      %p76 = pneg %p75
    $region39: #{tpu_custom_call.1} parent=1 // pred_check_branch
      %78 = sbr.rel (%p76) target = $region41
    $region40: #{tpu_custom_call.1} parent=1 // pred_region
      %79 = vst [vmem:[#allocation2] sm:$0x1] 0.0
      %80 = vst [vmem:[#allocation3] sm:$0x1] 0.0
    $region41: #{tpu_custom_call.1} parent=1 // pred_fallthru
      _
    %v81 = vlaneseq
    %v82 = vand.u32 %v81, 127
    %s83 = smul.u32 0, 128
    %v84 = vstv %s83
    %v85 = vadd.s32 %v82, %v84
    %vm86 = vcmp.lt.s32.totalorder %v85, 8
    %v87 = vld [vmem:[#allocation4] sm:$0x1]
    %v88 = vld [vmem:[#allocation8] sm:$0x1]
    %v89 = vsub.f32 %v87, %v88
    %v90 = vld [vmem:[#allocation2] sm:$0x1]
    %v91 = vmul.f32 %v89, %v89
    %v92 = vsel %vm86, %v91, 0.0
    %v93 = vadd.f32 %v90, %v92
    %94 = vst [vmem:[#allocation2] sm:$0x1] %v93
    %v95 = vld [vmem:[#allocation10] sm:$0x7f]
    %v96 = vld [vmem:[%s3] sm:$0x1]
    %v97 = vlaneseq
    %v98 = vshrl.u32 %v97, 7
    %vm99 = vcmask 1046528
    %v100 = vsel %vm99, %v95, -inf
    %v101 = vrot.slane %v100, 4
    %v102 = vmax.f32 %v100, %v101
    %v103 = vrot.slane %v102, 2
    %v104 = vmax.f32 %v102, %v103
    %v105 = vrot.slane %v104, 1
    %v106 = vmax.f32 %v104, %v105
    %v107 = vsub.f32 %v95, %v106
    %v108 = vmul.f32 %v107, 1.442695
    %v109 = vpow.pop %v108
    %v110 = vsel %vm99, %v109, 0.0
    %v111 = vrot.slane %v110, 4
    %v112 = vadd.f32 %v110, %v111
    %v113 = vrot.slane %v112, 2
    %v114 = vadd.f32 %v112, %v113
    %v115 = vrot.slane %v114, 1
    %v116 = vadd.f32 %v114, %v115
    %v117 = vlog2.pop %v116
    %v118 = vmul.f32 %v117, 0.6931472
    %v119 = vadd.f32 %v118, %v106
    %v120 = vperm.slane %v96, 0
    %vm121 = vcmp.eq.s32.totalorder %v98, %v120
    %v122 = vsel %vm121, %v95, 0.0
    %v123 = vsel %vm99, %v122, 0.0
    %v124 = vrot.slane %v123, 4
    %v125 = vadd.f32 %v123, %v124
    %v126 = vrot.slane %v125, 2
    %v127 = vadd.f32 %v125, %v126
    %v128 = vrot.slane %v127, 1
    %v129 = vadd.f32 %v127, %v128
    %v130 = vsub.f32 %v119, %v129
    %v131 = vld [vmem:[#allocation3] sm:$0x1]
    %v132 = vsel %vm86, %v130, 0.0
    %v133 = vadd.f32 %v131, %v132
    %134 = vst [vmem:[#allocation3] sm:$0x1] %v133
    // Predicated region
    $region42: #{tpu_custom_call.1} parent=1 // pred_check
      %p135 = pneg %p75
    $region43: #{tpu_custom_call.1} parent=1 // pred_check_branch
      %137 = sbr.rel (%p135) target = $region45
    $region44: #{tpu_custom_call.1} parent=1 // pred_region
      %v138 = vld [vmem:[#allocation2] sm:$0x1]
      %vm139 = vcmask 1040384
      %v140 = vsel %vm139, %v138, 0.0
      %141 = vadd.xlane.f32.xlu0 %v140
      %v142 = vpop.xlane.xlu0 %141
      %v143 = vrot.slane %v142, 4
      %v144 = vadd.f32 %v142, %v143
      %v145 = vrot.slane %v144, 2
      %v146 = vadd.f32 %v144, %v145
      %v147 = vrot.slane %v146, 1
      %v148 = vadd.f32 %v146, %v147
      %s149 = vtos %v148
      %s150 = smul.f32 %s149, 0.125
      %v151 = vld [vmem:[#allocation3] sm:$0x1]
      %v152 = vsel %vm139, %v151, 0.0
      %153 = vadd.xlane.f32.xlu0 %v152
      %v154 = vpop.xlane.xlu0 %153
      %v155 = vrot.slane %v154, 4
      %v156 = vadd.f32 %v154, %v155
      %v157 = vrot.slane %v156, 2
      %v158 = vadd.f32 %v156, %v157
      %v159 = vrot.slane %v158, 1
      %v160 = vadd.f32 %v158, %v159
      %s161 = vtos %v160
      %s162 = smul.f32 %s161, 0.125
      %s163 = sld [smem:[#allocation11]]
      %s164 = sld [smem:[#allocation11 + $0x1]]
      %s165 = ssub.f32 0.0, %s163
      %v166 = vstv %s165
      %v167 = vmul.f32 %v166, 1.442695
      %v168 = vpow.pop %v167
      %s169 = vtos %v168
      %s170 = smul.f32 %s169, %s150
      %s171 = sadd.f32 %s170, %s163
      %s172 = ssub.f32 0.0, %s164
      %v173 = vstv %s172
      %v174 = vmul.f32 %v173, 1.442695
      %v175 = vpow.pop %v174
      %s176 = vtos %v175
      %s177 = smul.f32 %s176, %s162
      %s178 = sadd.f32 %s171, %s177
      %s179 = sadd.f32 %s178, %s164
      %v180 = vstv %s179
      %vm181 = vcmask 0
      %182 = vst.msk [vmem:[#allocation12] sm:$0x1] %vm181, %v180
    $region45: #{tpu_custom_call.1} parent=1 // pred_fallthru
      _
    // Predicated region
    $region46: #{tpu_custom_call.1} parent=1 // pred_check
      _
    $region47: #{tpu_custom_call.1} parent=1 // pred_check_branch
      %184 = sbr.rel (0) target = $region49
    $region48: #{tpu_custom_call.1} parent=1 // pred_region
      %186 = vsyncadd [#allocation6], 0
      %s188 = sshll.u32 [#allocation12], 4
      %s189 = int_to_ptr.vmem [resolvable:$true] %s188
      %s190 = sshll.u32 %s5, 4
      %s191 = int_to_ptr.hbm [resolvable:$true] %s190
      %193 = dma.vmem_to_hbm [thread:$0]  %s189, 16, %s191, [#allocation6]
    $region49: #{tpu_custom_call.1} parent=1 // pred_fallthru
      _
    // Predicated region
    $region50: #{tpu_custom_call.1} parent=1 // pred_check
      _
    $region51: #{tpu_custom_call.1} parent=1 // pred_check_branch
      %195 = sbr.rel (0) target = $region53
    $region52: #{tpu_custom_call.1} parent=1 // pred_region
      %197 = dma.done [#allocation6], 16
    $region53: #{tpu_custom_call.1} parent=1 // pred_fallthru
      _
    %198 = vsyncpa [#allocation5], 1
    %199 = vsyncpa [#allocation9], 1
    %200 = vsyncpa [#allocation6], 1
    %201 = vsyncpa [#allocation7], 1

</llo_original>
